<compile_context>
chip_gen: v6e
topology: v6e:2x2x1
jax: 0.10.0
libtpu: 0.0.40
codegen_flags: <defaults>
</compile_context>

<pallas_src>
import math

import jax
import jax.numpy as jnp
from jax.experimental import pallas as pl
from jax.experimental.pallas import tpu as pltpu

LANE = 128            # TPU lane width: pad every hidden/output feature dim to this
SUBLANE_B = 16        # batch-tile granularity (bf16 packs 2 rows per sublane)
DEFAULT_TILE_B = 1024  # multiple of 256 -> full-width MXU M passes on v6e/v7x


def _round_up(x, m):
    return (x + m - 1) // m * m


def _cdiv(a, b):
    return (a + b - 1) // b


def _choose_tile_b(B, max_tile=DEFAULT_TILE_B):
    """Batch-adaptive tile: <= max_tile rows, 16-row granularity, minimal
    remainder waste, and >=2 grid steps when the batch is big enough so
    both v7x TensorCores get work (harmless on single-TC v5e/v6e)."""
    min_tiles = 2 if B >= 2 * SUBLANE_B else 1
    n_tiles = max(_cdiv(B, max_tile), min_tiles)
    tile_b = _round_up(_cdiv(B, n_tiles), SUBLANE_B)
    return min(tile_b, max_tile)


def prepare_params(params):
    """One-time conversion of (w, b) pairs into the kernel's layout (hoisted
    out of the per-call path).

    * weights stored (in, out); fan_out padded to a 128 multiple for every
      layer; fan_in padded to a 128 multiple for every layer except layer 0
      (its fan_in is the raw flattened feature count and feeds the MXU
      directly); cast to bf16 (MXU-native).  Zero padding keeps padded lanes
      inert through bias-add / ReLU / following matmuls.
    * biases padded to the same fan_out, kept f32, and concatenated into a
      single (1, sum_fan_out) array.
    """
    weights, biases, offsets = [], [], []
    off = 0
    for idx, (w, b) in enumerate(params):
        fi, fo = w.shape
        fi_p = fi if idx == 0 else _round_up(fi, LANE)
        fo_p = _round_up(fo, LANE)
        w_p = jnp.pad(w, ((0, fi_p - fi), (0, fo_p - fo))).astype(jnp.bfloat16)
        b_p = jnp.pad(b.reshape(1, -1), ((0, 0), (0, fo_p - fo))).astype(jnp.float32)
        weights.append(w_p)
        biases.append(b_p)
        offsets.append((off, off + fo_p))
        off += fo_p
    return {
        "weights": tuple(weights),
        "bias": jnp.concatenate(biases, axis=1),
        "bias_slices": tuple(offsets),
        "num_classes": params[-1][0].shape[1],
    }


def prototype_forward(x, prepared, *, tile_b=None):
    """Flatten input and run the fused 5-layer Pallas MLP."""
    weights = prepared["weights"]
    bias = prepared["bias"]
    bias_slices = prepared["bias_slices"]
    num_classes = prepared["num_classes"]
    assert len(weights) == 5, "prototype has exactly 5 linear layers"

    B = x.shape[0]
    x2d = x.reshape(B, -1)                 # flatten only: no dtype change, no lane pad
    F = x2d.shape[1]
    assert F == weights[0].shape[0], (F, weights[0].shape)

    if tile_b is None:
        tile_b = _choose_tile_b(B)
    tile_b = max(SUBLANE_B, _round_up(tile_b, SUBLANE_B))
    B_pad = _round_up(B, tile_b)
    if B_pad != B:                          # pad batch rows only (cheap: F lanes wide)
        x2d = jnp.pad(x2d, ((0, B_pad - B), (0, 0)))

    C_pad = weights[-1].shape[1]
    grid = (B_pad // tile_b,)

    def mlp_kernel(x_ref, w0_ref, w1_ref, w2_ref, w3_ref, w4_ref, b_ref, out_ref):
        """Fused MLP: bf16 MXU matmuls, f32 accumulation, ReLU between layers."""

        def layer(h_bf16, w_ref, sl, relu):
            acc = jnp.dot(h_bf16, w_ref[...], preferred_element_type=jnp.float32)
            acc = acc + b_ref[:, sl[0]:sl[1]]          # (1, N) broadcasts over tile
            return jnp.maximum(acc, 0.0) if relu else acc

        h = x_ref[...].astype(jnp.bfloat16)            # cast in-kernel (cheap VPU op)
        h = layer(h, w0_ref, bias_slices[0], True).astype(jnp.bfloat16)
        h = layer(h, w1_ref, bias_slices[1], True).astype(jnp.bfloat16)
        h = layer(h, w2_ref, bias_slices[2], True).astype(jnp.bfloat16)
        h = layer(h, w3_ref, bias_slices[3], True).astype(jnp.bfloat16)
        h = layer(h, w4_ref, bias_slices[4], False)    # final layer: no ReLU, f32
        out_ref[...] = h.astype(out_ref.dtype)

    # x / out move with the batch grid; weights & bias stay resident (constant index_map).
    in_specs = [pl.BlockSpec((tile_b, F), lambda i: (i, 0))]
    for w in weights:
        in_specs.append(pl.BlockSpec(w.shape, lambda i: (0, 0)))
    in_specs.append(pl.BlockSpec(bias.shape, lambda i: (0, 0)))
    out_spec = pl.BlockSpec((tile_b, C_pad), lambda i: (i, 0))

    # advisory cost estimate for XLA's scheduler
    dims = [F] + [w.shape[1] for w in weights]
    flops = 2 * B_pad * sum(dims[i] * dims[i + 1] for i in range(len(dims) - 1))
    bytes_accessed = (x2d.size * x2d.dtype.itemsize
                      + sum(w.size * 2 for w in weights)
                      + bias.size * 4
                      + B_pad * C_pad * 4)
    cost = pl.CostEstimate(flops=flops, transcendentals=0,
                           bytes_accessed=bytes_accessed)

    out_padded = pl.pallas_call(
        mlp_kernel,
        out_shape=jax.ShapeDtypeStruct((B_pad, C_pad), jnp.float32),
        grid=grid,
        in_specs=in_specs,
        out_specs=out_spec,
        compiler_params=pltpu.CompilerParams(
            dimension_semantics=("parallel",),
            vmem_limit_bytes=32 * 1024 * 1024),
        cost_estimate=cost,
    )(x2d, *weights, bias)

    # slice away batch padding and class-lane padding
    return out_padded[:B, :num_classes]


def init_params(key, num_inputs, num_classes):
    """Deterministic init matching nn.Linear's U(-1/sqrt(fan_in), 1/sqrt(fan_in))."""
    dims = [num_inputs, 50, 100, 200, 400, num_classes]
    params = []
    for i in range(len(dims) - 1):
        fan_in, fan_out = dims[i], dims[i + 1]
        key, kw, kb = jax.random.split(key, 3)
        bound = 1.0 / math.sqrt(fan_in)
        # stored as (in, out)  ==  PyTorch weight (out, in) transposed
        w = jax.random.uniform(kw, (fan_in, fan_out), jnp.float32, -bound, bound)
        b = jax.random.uniform(kb, (1, fan_out), jnp.float32, -bound, bound)
        params.append((w, b))
    return params


def reference_forward_f32(x, params):
    """Plain-JAX f32 reference (exact PyTorch-forward semantics)."""
    h = x.reshape(x.shape[0], -1).astype(jnp.float32)
    for i, (w, b) in enumerate(params):
        h = h @ w + b
        if i < len(params) - 1:
            h = jnp.maximum(h, 0.0)
    return h


def reference_forward_bf16(x, params):
    """Plain-JAX reference using the kernel's bf16-input / f32-accumulate math."""
    h = x.reshape(x.shape[0], -1).astype(jnp.bfloat16)
    for i, (w, b) in enumerate(params):
        h = jnp.dot(h, w.astype(jnp.bfloat16),
                    preferred_element_type=jnp.float32) + b.astype(jnp.float32)
        if i < len(params) - 1:
            h = jnp.maximum(h, 0.0)
            h = h.astype(jnp.bfloat16)
    return h


if __name__ == "__main__":
    num_inputs = 32     # flattened feature count (4 * 8)
    num_classes = 10
    batch = 8

    key = jax.random.PRNGKey(0)
    key, kx, kp = jax.random.split(key, 3)
    # input shaped like something that gets flattened (B, 4, 8) -> (B, 32)
    x = jax.random.normal(kx, (batch, 4, 8), jnp.float32)

    params = init_params(kp, num_inputs, num_classes)
    prepared = prepare_params(params)            # one-time weight pad/cast (hoisted)

    out = prototype_forward(x, prepared)
    out = jax.block_until_ready(out)
    assert out.shape == (batch, num_classes), out.shape

    # Exact-semantics check vs. a bf16/f32-accumulate reference.
    ref_bf16 = reference_forward_bf16(x, params)
    assert jnp.allclose(out, ref_bf16, atol=1e-3, rtol=1e-3), \
        f"bf16-ref max abs err = {jnp.max(jnp.abs(out - ref_bf16))}"

    # Loose check vs. pure f32 reference (bf16 weights introduce ~0.1-1% error).
    ref_f32 = reference_forward_f32(x, params)
    assert jnp.allclose(out, ref_f32, atol=1e-1, rtol=1e-1), \
        f"f32-ref max abs err = {jnp.max(jnp.abs(out - ref_f32))}"

    print("KERNEL_OK")
</pallas_src>

<mosaic_0001>
module attributes {stable_mosaic.version = 11 : i64} {
  func.func @mlp_kernel(%arg0: i32, %arg1: memref<16x32xf32, #tpu.memory_space<vmem>>, %arg2: memref<32x128xbf16, #tpu.memory_space<vmem>>, %arg3: memref<128x128xbf16, #tpu.memory_space<vmem>>, %arg4: memref<128x256xbf16, #tpu.memory_space<vmem>>, %arg5: memref<256x512xbf16, #tpu.memory_space<vmem>>, %arg6: memref<512x128xbf16, #tpu.memory_space<vmem>>, %arg7: memref<1x1152xf32, #tpu.memory_space<vmem>>, %arg8: memref<16x128xf32, #tpu.memory_space<vmem>>) attributes {dimension_semantics = [#tpu.dimension_semantics<parallel>], iteration_bounds = array<i64: 1>, scalar_prefetch = 0 : i64, scratch_operands = 0 : i64, tpu.core_type = #tpu.core_type<tc>, window_params = [{transform_indices = @transform_0, window_bounds = array<i64: 16, 32>}, {pipeline_mode = #tpu.pipeline_mode<synchronous>, transform_indices = @transform_1, window_bounds = array<i64: 32, 128>}, {pipeline_mode = #tpu.pipeline_mode<synchronous>, transform_indices = @transform_2, window_bounds = array<i64: 128, 128>}, {pipeline_mode = #tpu.pipeline_mode<synchronous>, transform_indices = @transform_3, window_bounds = array<i64: 128, 256>}, {pipeline_mode = #tpu.pipeline_mode<synchronous>, transform_indices = @transform_4, window_bounds = array<i64: 256, 512>}, {pipeline_mode = #tpu.pipeline_mode<synchronous>, transform_indices = @transform_5, window_bounds = array<i64: 512, 128>}, {pipeline_mode = #tpu.pipeline_mode<synchronous>, transform_indices = @transform_6, window_bounds = array<i64: 1, 1152>}, {transform_indices = @transform_7, window_bounds = array<i64: 16, 128>}]} {
    %c0 = arith.constant 0 : index
    %c0_0 = arith.constant 0 : index
    %0 = vector.load %arg1[%c0, %c0_0] : memref<16x32xf32, #tpu.memory_space<vmem>>, vector<16x32xf32>
    %1 = arith.truncf %0 : vector<16x32xf32> to vector<16x32xbf16>
    %c0_1 = arith.constant 0 : index
    %c0_2 = arith.constant 0 : index
    %2 = vector.load %arg2[%c0_1, %c0_2] : memref<32x128xbf16, #tpu.memory_space<vmem>>, vector<32x128xbf16>
    %cst = arith.constant dense<0.000000e+00> : vector<16x128xf32>
    %3 = tpu.matmul %1, %2, %cst {dimension_numbers = #tpu.dot_dimension_numbers<[1], [0], [0], [1], [0, 0, 1, 1], [], []>} : vector<16x32xbf16>, vector<32x128xbf16>, vector<16x128xf32> -> vector<16x128xf32>
    %c0_3 = arith.constant 0 : index
    %c0_4 = arith.constant 0 : index
    %4 = vector.load %arg7[%c0_3, %c0_4] : memref<1x1152xf32, #tpu.memory_space<vmem>>, vector<1x128xf32>
    %5 = vector.broadcast %4 : vector<1x128xf32> to vector<16x128xf32>
    %6 = arith.addf %3, %5 : vector<16x128xf32>
    %cst_5 = arith.constant 0.000000e+00 : f32
    %7 = vector.broadcast %cst_5 : f32 to vector<16x128xf32>
    %8 = arith.maximumf %6, %7 : vector<16x128xf32>
    %9 = arith.truncf %8 : vector<16x128xf32> to vector<16x128xbf16>
    %c0_6 = arith.constant 0 : index
    %c0_7 = arith.constant 0 : index
    %10 = vector.load %arg3[%c0_6, %c0_7] : memref<128x128xbf16, #tpu.memory_space<vmem>>, vector<128x128xbf16>
    %cst_8 = arith.constant dense<0.000000e+00> : vector<16x128xf32>
    %11 = tpu.matmul %9, %10, %cst_8 {dimension_numbers = #tpu.dot_dimension_numbers<[1], [0], [0], [1], [0, 0, 1, 1], [], []>} : vector<16x128xbf16>, vector<128x128xbf16>, vector<16x128xf32> -> vector<16x128xf32>
    %c0_9 = arith.constant 0 : index
    %c128 = arith.constant 128 : index
    %12 = vector.load %arg7[%c0_9, %c128] : memref<1x1152xf32, #tpu.memory_space<vmem>>, vector<1x128xf32>
    %13 = vector.broadcast %12 : vector<1x128xf32> to vector<16x128xf32>
    %14 = arith.addf %11, %13 : vector<16x128xf32>
    %cst_10 = arith.constant 0.000000e+00 : f32
    %15 = vector.broadcast %cst_10 : f32 to vector<16x128xf32>
    %16 = arith.maximumf %14, %15 : vector<16x128xf32>
    %17 = arith.truncf %16 : vector<16x128xf32> to vector<16x128xbf16>
    %c0_11 = arith.constant 0 : index
    %c0_12 = arith.constant 0 : index
    %18 = vector.load %arg4[%c0_11, %c0_12] : memref<128x256xbf16, #tpu.memory_space<vmem>>, vector<128x256xbf16>
    %cst_13 = arith.constant dense<0.000000e+00> : vector<16x256xf32>
    %19 = tpu.matmul %17, %18, %cst_13 {dimension_numbers = #tpu.dot_dimension_numbers<[1], [0], [0], [1], [0, 0, 1, 1], [], []>} : vector<16x128xbf16>, vector<128x256xbf16>, vector<16x256xf32> -> vector<16x256xf32>
    %c0_14 = arith.constant 0 : index
    %c256 = arith.constant 256 : index
    %20 = vector.load %arg7[%c0_14, %c256] : memref<1x1152xf32, #tpu.memory_space<vmem>>, vector<1x256xf32>
    %21 = vector.broadcast %20 : vector<1x256xf32> to vector<16x256xf32>
    %22 = arith.addf %19, %21 : vector<16x256xf32>
    %cst_15 = arith.constant 0.000000e+00 : f32
    %23 = vector.broadcast %cst_15 : f32 to vector<16x256xf32>
    %24 = arith.maximumf %22, %23 : vector<16x256xf32>
    %25 = arith.truncf %24 : vector<16x256xf32> to vector<16x256xbf16>
    %c0_16 = arith.constant 0 : index
    %c0_17 = arith.constant 0 : index
    %26 = vector.load %arg5[%c0_16, %c0_17] : memref<256x512xbf16, #tpu.memory_space<vmem>>, vector<256x512xbf16>
    %cst_18 = arith.constant dense<0.000000e+00> : vector<16x512xf32>
    %27 = tpu.matmul %25, %26, %cst_18 {dimension_numbers = #tpu.dot_dimension_numbers<[1], [0], [0], [1], [0, 0, 1, 1], [], []>} : vector<16x256xbf16>, vector<256x512xbf16>, vector<16x512xf32> -> vector<16x512xf32>
    %c0_19 = arith.constant 0 : index
    %c512 = arith.constant 512 : index
    %28 = vector.load %arg7[%c0_19, %c512] : memref<1x1152xf32, #tpu.memory_space<vmem>>, vector<1x512xf32>
    %29 = vector.broadcast %28 : vector<1x512xf32> to vector<16x512xf32>
    %30 = arith.addf %27, %29 : vector<16x512xf32>
    %cst_20 = arith.constant 0.000000e+00 : f32
    %31 = vector.broadcast %cst_20 : f32 to vector<16x512xf32>
    %32 = arith.maximumf %30, %31 : vector<16x512xf32>
    %33 = arith.truncf %32 : vector<16x512xf32> to vector<16x512xbf16>
    %c0_21 = arith.constant 0 : index
    %c0_22 = arith.constant 0 : index
    %34 = vector.load %arg6[%c0_21, %c0_22] : memref<512x128xbf16, #tpu.memory_space<vmem>>, vector<512x128xbf16>
    %cst_23 = arith.constant dense<0.000000e+00> : vector<16x128xf32>
    %35 = tpu.matmul %33, %34, %cst_23 {dimension_numbers = #tpu.dot_dimension_numbers<[1], [0], [0], [1], [0, 0, 1, 1], [], []>} : vector<16x512xbf16>, vector<512x128xbf16>, vector<16x128xf32> -> vector<16x128xf32>
    %c0_24 = arith.constant 0 : index
    %c1024 = arith.constant 1024 : index
    %36 = vector.load %arg7[%c0_24, %c1024] : memref<1x1152xf32, #tpu.memory_space<vmem>>, vector<1x128xf32>
    %37 = vector.broadcast %36 : vector<1x128xf32> to vector<16x128xf32>
    %38 = arith.addf %35, %37 : vector<16x128xf32>
    %c0_25 = arith.constant 0 : index
    %c0_26 = arith.constant 0 : index
    %39 = vector.load %arg8[%c0_25, %c0_26] : memref<16x128xf32, #tpu.memory_space<vmem>>, vector<16x128xf32>
    tpu.vector_store %arg8[%c0_25, %c0_26], %38 {strides = array<i32>} : memref<16x128xf32, #tpu.memory_space<vmem>>, vector<16x128xf32>,
    return
  }
  func.func @transform_0(%arg0: i32) -> (i32, i32) {
    %c0_i32 = arith.constant 0 : i32
    %c0_i32_0 = arith.constant 0 : i32
    return %arg0, %c0_i32 : i32, i32
  }
  func.func @transform_1(%arg0: i32) -> (i32, i32) {
    %c0_i32 = arith.constant 0 : i32
    %c0_i32_0 = arith.constant 0 : i32
    %c0_i32_1 = arith.constant 0 : i32
    return %c0_i32, %c0_i32_0 : i32, i32
  }
  func.func @transform_2(%arg0: i32) -> (i32, i32) {
    %c0_i32 = arith.constant 0 : i32
    %c0_i32_0 = arith.constant 0 : i32
    %c0_i32_1 = arith.constant 0 : i32
    return %c0_i32, %c0_i32_0 : i32, i32
  }
  func.func @transform_3(%arg0: i32) -> (i32, i32) {
    %c0_i32 = arith.constant 0 : i32
    %c0_i32_0 = arith.constant 0 : i32
    %c0_i32_1 = arith.constant 0 : i32
    return %c0_i32, %c0_i32_0 : i32, i32
  }
  func.func @transform_4(%arg0: i32) -> (i32, i32) {
    %c0_i32 = arith.constant 0 : i32
    %c0_i32_0 = arith.constant 0 : i32
    %c0_i32_1 = arith.constant 0 : i32
    return %c0_i32, %c0_i32_0 : i32, i32
  }
  func.func @transform_5(%arg0: i32) -> (i32, i32) {
    %c0_i32 = arith.constant 0 : i32
    %c0_i32_0 = arith.constant 0 : i32
    %c0_i32_1 = arith.constant 0 : i32
    return %c0_i32, %c0_i32_0 : i32, i32
  }
  func.func @transform_6(%arg0: i32) -> (i32, i32) {
    %c0_i32 = arith.constant 0 : i32
    %c0_i32_0 = arith.constant 0 : i32
    %c0_i32_1 = arith.constant 0 : i32
    return %c0_i32, %c0_i32_0 : i32, i32
  }
  func.func @transform_7(%arg0: i32) -> (i32, i32) {
    %c0_i32 = arith.constant 0 : i32
    %c0_i32_0 = arith.constant 0 : i32
    return %arg0, %c0_i32 : i32, i32
  }
}

</mosaic_0001>

<llo_original>
// kernel: tpu_custom_call.1
$region0: #{tpu_custom_call.1}
  #allocation0 [shape = 'u32[]', space=smem, size = 0x4, offset = 0x4, fixed_abs, tag = 'smem constant byte address 0x4 - core index']
  #allocation1 [shape = 'u32[144,128]{1,0:T(1,128)}', space=vmem, size = 0x12000, scoped, tag = 'internal scratch']
  %s0 = inlined_call_operand.hbm [shape: f32[16,32], index: 0, kind: input, shape index: {}]
  %s1 = inlined_call_operand.hbm [shape: bf16[32,128], index: 1, kind: input, shape index: {}]
  %s2 = inlined_call_operand.hbm [shape: bf16[128,128], index: 2, kind: input, shape index: {}]
  %s3 = inlined_call_operand.hbm [shape: bf16[128,256], index: 3, kind: input, shape index: {}]
  %s4 = inlined_call_operand.hbm [shape: bf16[256,512], index: 4, kind: input, shape index: {}]
  %s5 = inlined_call_operand.hbm [shape: bf16[512,128], index: 5, kind: input, shape index: {}]
  %s6 = inlined_call_operand.vmem [shape: f32[1,1152], index: 6, kind: input, shape index: {}]
  %s7 = inlined_call_operand.hbm [shape: f32[16,128], index: 7, kind: output, shape index: {}]
  %s8 = sld [smem:[#allocation0]]
  $region62: #{tpu_custom_call.1} parent=0
    _
  %s10 = ssub.s32 1, %s8
  %s11 = scalar_select 0, %s10, %s8
  $region1: #{tpu_custom_call.1} parent=0
    #allocation2 [shape = 'u8[8192]{0}', space=vmem, size = 0x2000, scoped, tag = 'input window, operand 0, single buffered']
    #allocation3 [shape = 's32[1]{0}', space=sflag, size = 0x4, scoped, tag = 'scoped memory for tpu_custom_call.1']
    #allocation4 [shape = 's32[1]{0}', space=sflag, size = 0x4, scoped, tag = 'scoped memory for tpu_custom_call.1']
    #allocation5 [shape = 'u8[8192]{0}', space=vmem, size = 0x2000, scoped, tag = 'input window, operand 1, single buffered']
    #allocation6 [shape = 's32[1]{0}', space=sflag, size = 0x4, scoped, tag = 'scoped memory for tpu_custom_call.1']
    #allocation7 [shape = 'u8[32768]{0}', space=vmem, size = 0x8000, scoped, tag = 'input window, operand 2, single buffered']
    #allocation8 [shape = 'u8[65536]{0}', space=vmem, size = 0x10000, scoped, tag = 'input window, operand 3, single buffered']
    #allocation9 [shape = 's32[1]{0}', space=sflag, size = 0x4, scoped, tag = 'scoped memory for tpu_custom_call.1']
    #allocation10 [shape = 'u8[262144]{0}', space=vmem, size = 0x40000, scoped, tag = 'input window, operand 4, single buffered']
    #allocation11 [shape = 'u8[131072]{0}', space=vmem, size = 0x20000, scoped, tag = 'input window, operand 5, single buffered']
    #allocation12 [shape = 's32[1]{0}', space=sflag, size = 0x4, scoped, tag = 'scoped memory for tpu_custom_call.1']
    #allocation13 [shape = 'u8[8192]{0}', space=vmem, size = 0x2000, scoped, tag = 'output window, operand 0, single buffered']
    %12 = vsyncpa [#allocation3], 0
    %13 = vsyncpa [#allocation6], 0
    %14 = vsyncpa [#allocation9], 0
    %15 = vsyncpa [#allocation12], 0
    %16 = vsyncpa [#allocation4], 0
    // Predicated region
    $region2: #{tpu_custom_call.1} parent=1 // pred_check
      _
    $region3: #{tpu_custom_call.1} parent=1 // pred_check_branch
      %18 = sbr.rel (0) target = $region5
    $region4: #{tpu_custom_call.1} parent=1 // pred_region
      %s20 = ssub.s32 256, 256
      %21 = vsyncadd [#allocation3], %s20
      %s22 = sshll.u32 [#allocation2], 4
      %s23 = int_to_ptr.vmem [resolvable:$true] %s22
      %28 = dma.hbm_to_vmem [thread:$0]  %s0, 256, %s23, [#allocation3], 128, 128, 8
    $region5: #{tpu_custom_call.1} parent=1 // pred_fallthru
      _
    // Predicated region
    $region6: #{tpu_custom_call.1} parent=1 // pred_check
      _
    $region7: #{tpu_custom_call.1} parent=1 // pred_check_branch
      %30 = sbr.rel (0) target = $region9
    $region8: #{tpu_custom_call.1} parent=1 // pred_region
      %s32 = ssub.s32 256, 256
      %33 = vsyncadd [#allocation6], %s32
      %s34 = sshll.u32 [#allocation5], 4
      %s35 = int_to_ptr.vmem [resolvable:$true] %s34
      %40 = dma.hbm_to_vmem [thread:$0]  %s1, 256, %s35, [#allocation6], 64, 64, 4
    $region9: #{tpu_custom_call.1} parent=1 // pred_fallthru
      _
    // Predicated region
    $region10: #{tpu_custom_call.1} parent=1 // pred_check
      _
    $region11: #{tpu_custom_call.1} parent=1 // pred_check_branch
      %42 = sbr.rel (0) target = $region13
    $region12: #{tpu_custom_call.1} parent=1 // pred_region
      %s44 = ssub.s32 1024, 1024
      %45 = vsyncadd [#allocation6], %s44
      %s46 = sshll.u32 [#allocation7], 4
      %s47 = int_to_ptr.vmem [resolvable:$true] %s46
      %52 = dma.hbm_to_vmem [thread:$0]  %s2, 1024, %s47, [#allocation6], 64, 64, 4
    $region13: #{tpu_custom_call.1} parent=1 // pred_fallthru
      _
    // Predicated region
    $region14: #{tpu_custom_call.1} parent=1 // pred_check
      _
    $region15: #{tpu_custom_call.1} parent=1 // pred_check_branch
      %54 = sbr.rel (0) target = $region17
    $region16: #{tpu_custom_call.1} parent=1 // pred_region
      %s56 = ssub.s32 2048, 2048
      %57 = vsyncadd [#allocation9], %s56
      %s58 = sshll.u32 [#allocation8], 4
      %s59 = int_to_ptr.vmem [resolvable:$true] %s58
      %64 = dma.hbm_to_vmem [thread:$0]  %s3, 2048, %s59, [#allocation9], 128, 128, 8
    $region17: #{tpu_custom_call.1} parent=1 // pred_fallthru
      _
    // Predicated region
    $region18: #{tpu_custom_call.1} parent=1 // pred_check
      _
    $region19: #{tpu_custom_call.1} parent=1 // pred_check_branch
      %66 = sbr.rel (0) target = $region21
    $region20: #{tpu_custom_call.1} parent=1 // pred_region
      %s68 = ssub.s32 8192, 8192
      %69 = vsyncadd [#allocation9], %s68
      %s70 = sshll.u32 [#allocation10], 4
      %s71 = int_to_ptr.vmem [resolvable:$true] %s70
      %76 = dma.hbm_to_vmem [thread:$0]  %s4, 8192, %s71, [#allocation9], 256, 256, 16
    $region21: #{tpu_custom_call.1} parent=1 // pred_fallthru
      _
    // Predicated region
    $region22: #{tpu_custom_call.1} parent=1 // pred_check
      _
    $region23: #{tpu_custom_call.1} parent=1 // pred_check_branch
      %78 = sbr.rel (0) target = $region25
    $region24: #{tpu_custom_call.1} parent=1 // pred_region
      %s80 = ssub.s32 4096, 4096
      %81 = vsyncadd [#allocation12], %s80
      %s82 = sshll.u32 [#allocation11], 4
      %s83 = int_to_ptr.vmem [resolvable:$true] %s82
      %88 = dma.hbm_to_vmem [thread:$0]  %s5, 4096, %s83, [#allocation12], 64, 64, 4
    $region25: #{tpu_custom_call.1} parent=1 // pred_fallthru
      _
    // Predicated region
    $region26: #{tpu_custom_call.1} parent=1 // pred_check
      _
    $region27: #{tpu_custom_call.1} parent=1 // pred_check_branch
      %90 = sbr.rel (0) target = $region29
    $region28: #{tpu_custom_call.1} parent=1 // pred_region
      _
    $region29: #{tpu_custom_call.1} parent=1 // pred_fallthru
      _
    // Predicated region
    $region30: #{tpu_custom_call.1} parent=1 // pred_check
      _
    $region31: #{tpu_custom_call.1} parent=1 // pred_check_branch
      %92 = sbr.rel (0) target = $region33
    $region32: #{tpu_custom_call.1} parent=1 // pred_region
      %93 = dma.done [#allocation3], 256
    $region33: #{tpu_custom_call.1} parent=1 // pred_fallthru
      _
    // Predicated region
    $region34: #{tpu_custom_call.1} parent=1 // pred_check
      _
    $region35: #{tpu_custom_call.1} parent=1 // pred_check_branch
      %95 = sbr.rel (0) target = $region37
    $region36: #{tpu_custom_call.1} parent=1 // pred_region
      %96 = dma.done [#allocation6], 256
    $region37: #{tpu_custom_call.1} parent=1 // pred_fallthru
      _
    // Predicated region
    $region38: #{tpu_custom_call.1} parent=1 // pred_check
      _
    $region39: #{tpu_custom_call.1} parent=1 // pred_check_branch
      %98 = sbr.rel (0) target = $region41
    $region40: #{tpu_custom_call.1} parent=1 // pred_region
      %99 = dma.done [#allocation6], 1024
    $region41: #{tpu_custom_call.1} parent=1 // pred_fallthru
      _
    // Predicated region
    $region42: #{tpu_custom_call.1} parent=1 // pred_check
      _
    $region43: #{tpu_custom_call.1} parent=1 // pred_check_branch
      %101 = sbr.rel (0) target = $region45
    $region44: #{tpu_custom_call.1} parent=1 // pred_region
      %102 = dma.done [#allocation9], 2048
    $region45: #{tpu_custom_call.1} parent=1 // pred_fallthru
      _
    // Predicated region
    $region46: #{tpu_custom_call.1} parent=1 // pred_check
      _
    $region47: #{tpu_custom_call.1} parent=1 // pred_check_branch
      %104 = sbr.rel (0) target = $region49
    $region48: #{tpu_custom_call.1} parent=1 // pred_region
      %105 = dma.done [#allocation9], 8192
    $region49: #{tpu_custom_call.1} parent=1 // pred_fallthru
      _
    // Predicated region
    $region50: #{tpu_custom_call.1} parent=1 // pred_check
      _
    $region51: #{tpu_custom_call.1} parent=1 // pred_check_branch
      %107 = sbr.rel (0) target = $region53
    $region52: #{tpu_custom_call.1} parent=1 // pred_region
      %108 = dma.done [#allocation12], 4096
    $region53: #{tpu_custom_call.1} parent=1 // pred_fallthru
      _
    %v110 = vld [vmem:[#allocation2] sm:$0xff]
    %v111 = vld [vmem:[#allocation2 + $0x8] sm:$0xff]
    %v112 = vpack.c.bf16 %v111, %v110
    %v113 = vld [vmem:[#allocation5] sm:$0xf]
    %v114 = vld [vmem:[#allocation5 + $0x4] sm:$0xf]
    %v115 = vld [vmem:[#allocation5 + $0x8] sm:$0xf]
    %v116 = vld [vmem:[#allocation5 + $0xc] sm:$0xf]
    %v117 = vld [vmem:[%s6] sm:$0x1]
    %v119 = vlaneseq
    %v120 = vshrl.u32 %v119, 7
    %v121 = vsub.s32 0, %v120
    %v122 = vrot.slane %v117, %v121
    %v128 = vunpack.c.l.b16 %v113
    %v129 = vunpack.c.l.b16 %v114
    %v130 = vunpack.c.l.b16 %v115
    %v131 = vunpack.c.l.b16 %v116
    %v132 = vpack.c.b16 %v129, %v128
    %v133 = vpack.c.b16 %v131, %v130
    %vm136 = vcmask 261120
    %v138 = vsel %vm136, %v112, 0
    %140 = vmatprep.subr.bf16.mxu0 0
    %141 = vmatpush1.bf16.msra.mxu0 0
    %142 = vmatprep.subr.bf16.mxu0 0
    %143 = vmatpush1.bf16.msra.mxu0 0
    %144 = vmatprep.subr.bf16.mxu0 0
    %145 = vmatpush1.bf16.msra.mxu0 0
    %146 = vmatprep.subr.bf16.mxu0 0
    %147 = vmatpush1.bf16.msra.mxu0 0
    %148 = vmatprep.subr.bf16.mxu0 0
    %149 = vmatpush1.bf16.msra.mxu0 0
    %150 = vmatprep.subr.bf16.mxu0 0
    %151 = vmatpush1.bf16.msra.mxu0 0
    %152 = vmatprep.subr.bf16.mxu0 0
    %153 = vmatpush1.bf16.msra.mxu0 %v133
    %154 = vmatprep.subr.bf16.mxu0 0
    %155 = vmatpush1.bf16.msra.mxu0 %v132
    %156 = vmatprep.subr.bf16.mxu0 0
    %157 = vmatpush2.bf16.msra.mxu0 0
    %158 = vmatprep.subr.bf16.mxu0 0
    %159 = vmatpush2.bf16.msra.mxu0 0
    %160 = vmatprep.subr.bf16.mxu0 0
    %161 = vmatpush2.bf16.msra.mxu0 0
    %162 = vmatprep.subr.bf16.mxu0 0
    %163 = vmatpush2.bf16.msra.mxu0 0
    %164 = vmatprep.subr.bf16.mxu0 0
    %165 = vmatpush2.bf16.msra.mxu0 0
    %166 = vmatprep.subr.bf16.mxu0 0
    %167 = vmatpush2.bf16.msra.mxu0 0
    %168 = vmatprep.subr.bf16.mxu0 0
    %169 = vmatpush2.bf16.msra.mxu0 0
    %170 = vmatprep.subr.bf16.mxu0 0
    %171 = vmatpush2.bf16.msra.mxu0 0
    %172 = vmatprep.mubr.bf16.mxu0 0
    %173 = vmatmul.mubr.bf16.gmra.mxu0 %v138
    %v174 = vpop.f32.mrf.mxu0
    %v175 = vadd.f32 %v122, %v174
    %v176 = vpop.f32.mrf.mxu0
    %v177 = vpop.f32.mrf.mxu0
    %v178 = vadd.f32 %v122, %v177
    %v179 = vpop.f32.mrf.mxu0
    %180 = vdwg.mxu0
    %v181 = vmax.f32 %v175, 0.0
    %v182 = vmax.f32 %v178, 0.0
    %v183 = vpack.c.bf16 %v182, %v181
    %v184 = vld [vmem:[#allocation7] sm:$0xf]
    %v185 = vld [vmem:[#allocation7 + $0x4] sm:$0xf]
    %v186 = vld [vmem:[#allocation7 + $0x8] sm:$0xf]
    %v187 = vld [vmem:[#allocation7 + $0xc] sm:$0xf]
    %v188 = vld [vmem:[#allocation7 + $0x10] sm:$0xf]
    %v189 = vld [vmem:[#allocation7 + $0x14] sm:$0xf]
    %v190 = vld [vmem:[#allocation7 + $0x18] sm:$0xf]
    %v191 = vld [vmem:[#allocation7 + $0x1c] sm:$0xf]
    %v192 = vld [vmem:[#allocation7 + $0x20] sm:$0xf]
    %v193 = vld [vmem:[#allocation7 + $0x24] sm:$0xf]
    %v194 = vld [vmem:[#allocation7 + $0x28] sm:$0xf]
    %v195 = vld [vmem:[#allocation7 + $0x2c] sm:$0xf]
    %v196 = vld [vmem:[#allocation7 + $0x30] sm:$0xf]
    %v197 = vld [vmem:[#allocation7 + $0x34] sm:$0xf]
    %v198 = vld [vmem:[#allocation7 + $0x38] sm:$0xf]
    %v199 = vld [vmem:[#allocation7 + $0x3c] sm:$0xf]
    %v200 = vld [vmem:[%s6 + $0x1] sm:$0x1]
    %v202 = vlaneseq
    %v203 = vshrl.u32 %v202, 7
    %v204 = vsub.s32 0, %v203
    %v205 = vrot.slane %v200, %v204
    %v223 = vunpack.c.l.b16 %v184
    %v224 = vunpack.c.l.b16 %v185
    %v225 = vunpack.c.l.b16 %v186
    %v226 = vunpack.c.l.b16 %v187
    %v227 = vunpack.c.l.b16 %v188
    %v228 = vunpack.c.l.b16 %v189
    %v229 = vunpack.c.l.b16 %v190
    %v230 = vunpack.c.l.b16 %v191
    %v231 = vunpack.c.l.b16 %v192
    %v232 = vunpack.c.l.b16 %v193
    %v233 = vunpack.c.l.b16 %v194
    %v234 = vunpack.c.l.b16 %v195
    %v235 = vunpack.c.l.b16 %v196
    %v236 = vunpack.c.l.b16 %v197
    %v237 = vunpack.c.l.b16 %v198
    %v238 = vunpack.c.l.b16 %v199
    %v239 = vpack.c.b16 %v224, %v223
    %v240 = vpack.c.b16 %v226, %v225
    %v241 = vpack.c.b16 %v228, %v227
    %v242 = vpack.c.b16 %v230, %v229
    %v243 = vpack.c.b16 %v232, %v231
    %v244 = vpack.c.b16 %v234, %v233
    %v245 = vpack.c.b16 %v236, %v235
    %v246 = vpack.c.b16 %v238, %v237
    %255 = vmatprep.subr.bf16.mxu0 0
    %256 = vmatpush1.bf16.msra.mxu0 %v246
    %257 = vmatprep.subr.bf16.mxu0 0
    %258 = vmatpush1.bf16.msra.mxu0 %v245
    %259 = vmatprep.subr.bf16.mxu0 0
    %260 = vmatpush1.bf16.msra.mxu0 %v244
    %261 = vmatprep.subr.bf16.mxu0 0
    %262 = vmatpush1.bf16.msra.mxu0 %v243
    %263 = vmatprep.subr.bf16.mxu0 0
    %264 = vmatpush1.bf16.msra.mxu0 %v242
    %265 = vmatprep.subr.bf16.mxu0 0
    %266 = vmatpush1.bf16.msra.mxu0 %v241
    %267 = vmatprep.subr.bf16.mxu0 0
    %268 = vmatpush1.bf16.msra.mxu0 %v240
    %269 = vmatprep.subr.bf16.mxu0 0
    %270 = vmatpush1.bf16.msra.mxu0 %v239
    %271 = vmatprep.subr.bf16.mxu0 0
    %272 = vmatpush2.bf16.msra.mxu0 0
    %273 = vmatprep.subr.bf16.mxu0 0
    %274 = vmatpush2.bf16.msra.mxu0 0
    %275 = vmatprep.subr.bf16.mxu0 0
    %276 = vmatpush2.bf16.msra.mxu0 0
    %277 = vmatprep.subr.bf16.mxu0 0
    %278 = vmatpush2.bf16.msra.mxu0 0
    %279 = vmatprep.subr.bf16.mxu0 0
    %280 = vmatpush2.bf16.msra.mxu0 0
    %281 = vmatprep.subr.bf16.mxu0 0
    %282 = vmatpush2.bf16.msra.mxu0 0
    %283 = vmatprep.subr.bf16.mxu0 0
    %284 = vmatpush2.bf16.msra.mxu0 0
    %285 = vmatprep.subr.bf16.mxu0 0
    %286 = vmatpush2.bf16.msra.mxu0 0
    %287 = vmatprep.mubr.bf16.mxu0 0
    %288 = vmatmul.mubr.bf16.gmra.mxu0 %v183
    %v289 = vpop.f32.mrf.mxu0
    %v290 = vadd.f32 %v205, %v289
    %v291 = vpop.f32.mrf.mxu0
    %v292 = vpop.f32.mrf.mxu0
    %v293 = vadd.f32 %v205, %v292
    %v294 = vpop.f32.mrf.mxu0
    %295 = vdwg.mxu0
    %v296 = vmax.f32 %v290, 0.0
    %v297 = vmax.f32 %v293, 0.0
    %v298 = vpack.c.bf16 %v297, %v296
    %v299 = vld [vmem:[#allocation8] sm:$0xff]
    %v300 = vld [vmem:[#allocation8 + $0x8] sm:$0xff]
    %v301 = vld [vmem:[#allocation8 + $0x10] sm:$0xff]
    %v302 = vld [vmem:[#allocation8 + $0x18] sm:$0xff]
    %v303 = vld [vmem:[#allocation8 + $0x20] sm:$0xff]
    %v304 = vld [vmem:[#allocation8 + $0x28] sm:$0xff]
    %v305 = vld [vmem:[#allocation8 + $0x30] sm:$0xff]
    %v306 = vld [vmem:[#allocation8 + $0x38] sm:$0xff]
    %v307 = vld [vmem:[#allocation8 + $0x40] sm:$0xff]
    %v308 = vld [vmem:[#allocation8 + $0x48] sm:$0xff]
    %v309 = vld [vmem:[#allocation8 + $0x50] sm:$0xff]
    %v310 = vld [vmem:[#allocation8 + $0x58] sm:$0xff]
    %v311 = vld [vmem:[#allocation8 + $0x60] sm:$0xff]
    %v312 = vld [vmem:[#allocation8 + $0x68] sm:$0xff]
    %v313 = vld [vmem:[#allocation8 + $0x70] sm:$0xff]
    %v314 = vld [vmem:[#allocation8 + $0x78] sm:$0xff]
    %v315 = vld [vmem:[%s6 + $0x2] sm:$0x3]
    %v317 = vlaneseq
    %v318 = vshrl.u32 %v317, 7
    %v319 = vsub.s32 0, %v318
    %v320 = vrot.slane %v315, %v319
    %v321 = vlaneseq
    %v322 = vshrl.u32 %v321, 7
    %v323 = vsub.s32 1, %v322
    %v324 = vrot.slane %v315, %v323
    %v343 = vunpack.c.l.b16 %v299
    %v344 = vunpack.c.h.b16 %v299
    %v345 = vunpack.c.l.b16 %v300
    %v346 = vunpack.c.h.b16 %v300
    %v347 = vunpack.c.l.b16 %v301
    %v348 = vunpack.c.h.b16 %v301
    %v349 = vunpack.c.l.b16 %v302
    %v350 = vunpack.c.h.b16 %v302
    %v351 = vunpack.c.l.b16 %v303
    %v352 = vunpack.c.h.b16 %v303
    %v353 = vunpack.c.l.b16 %v304
    %v354 = vunpack.c.h.b16 %v304
    %v355 = vunpack.c.l.b16 %v305
    %v356 = vunpack.c.h.b16 %v305
    %v357 = vunpack.c.l.b16 %v306
    %v358 = vunpack.c.h.b16 %v306
    %v359 = vunpack.c.l.b16 %v307
    %v360 = vunpack.c.h.b16 %v307
    %v361 = vunpack.c.l.b16 %v308
    %v362 = vunpack.c.h.b16 %v308
    %v363 = vunpack.c.l.b16 %v309
    %v364 = vunpack.c.h.b16 %v309
    %v365 = vunpack.c.l.b16 %v310
    %v366 = vunpack.c.h.b16 %v310
    %v367 = vunpack.c.l.b16 %v311
    %v368 = vunpack.c.h.b16 %v311
    %v369 = vunpack.c.l.b16 %v312
    %v370 = vunpack.c.h.b16 %v312
    %v371 = vunpack.c.l.b16 %v313
    %v372 = vunpack.c.h.b16 %v313
    %v373 = vunpack.c.l.b16 %v314
    %v374 = vunpack.c.h.b16 %v314
    %v375 = vpack.c.b16 %v345, %v343
    %v376 = vpack.c.b16 %v346, %v344
    %v377 = vpack.c.b16 %v349, %v347
    %v378 = vpack.c.b16 %v350, %v348
    %v379 = vpack.c.b16 %v353, %v351
    %v380 = vpack.c.b16 %v354, %v352
    %v381 = vpack.c.b16 %v357, %v355
    %v382 = vpack.c.b16 %v358, %v356
    %v383 = vpack.c.b16 %v361, %v359
    %v384 = vpack.c.b16 %v362, %v360
    %v385 = vpack.c.b16 %v365, %v363
    %v386 = vpack.c.b16 %v366, %v364
    %v387 = vpack.c.b16 %v369, %v367
    %v388 = vpack.c.b16 %v370, %v368
    %v389 = vpack.c.b16 %v373, %v371
    %v390 = vpack.c.b16 %v374, %v372
    %407 = vmatprep.subr.bf16.mxu0 %v390
    %408 = vmatpush1.bf16.msra.mxu0 %v389
    %409 = vmatprep.subr.bf16.mxu0 %v388
    %410 = vmatpush1.bf16.msra.mxu0 %v387
    %411 = vmatprep.subr.bf16.mxu0 %v386
    %412 = vmatpush1.bf16.msra.mxu0 %v385
    %413 = vmatprep.subr.bf16.mxu0 %v384
    %414 = vmatpush1.bf16.msra.mxu0 %v383
    %415 = vmatprep.subr.bf16.mxu0 %v382
    %416 = vmatpush1.bf16.msra.mxu0 %v381
    %417 = vmatprep.subr.bf16.mxu0 %v380
    %418 = vmatpush1.bf16.msra.mxu0 %v379
    %419 = vmatprep.subr.bf16.mxu0 %v378
    %420 = vmatpush1.bf16.msra.mxu0 %v377
    %421 = vmatprep.subr.bf16.mxu0 %v376
    %422 = vmatpush1.bf16.msra.mxu0 %v375
    %423 = vmatprep.subr.bf16.mxu0 0
    %424 = vmatpush2.bf16.msra.mxu0 0
    %425 = vmatprep.subr.bf16.mxu0 0
    %426 = vmatpush2.bf16.msra.mxu0 0
    %427 = vmatprep.subr.bf16.mxu0 0
    %428 = vmatpush2.bf16.msra.mxu0 0
    %429 = vmatprep.subr.bf16.mxu0 0
    %430 = vmatpush2.bf16.msra.mxu0 0
    %431 = vmatprep.subr.bf16.mxu0 0
    %432 = vmatpush2.bf16.msra.mxu0 0
    %433 = vmatprep.subr.bf16.mxu0 0
    %434 = vmatpush2.bf16.msra.mxu0 0
    %435 = vmatprep.subr.bf16.mxu0 0
    %436 = vmatpush2.bf16.msra.mxu0 0
    %437 = vmatprep.subr.bf16.mxu0 0
    %438 = vmatpush2.bf16.msra.mxu0 0
    %439 = vmatprep.mubr.bf16.mxu0 0
    %440 = vmatmul.mubr.bf16.gmra.mxu0 %v298
    %v441 = vpop.f32.mrf.mxu0
    %v442 = vadd.f32 %v320, %v441
    %v443 = vpop.f32.mrf.mxu0
    %v444 = vadd.f32 %v324, %v443
    %v445 = vpop.f32.mrf.mxu0
    %v446 = vadd.f32 %v320, %v445
    %v447 = vpop.f32.mrf.mxu0
    %v448 = vadd.f32 %v324, %v447
    %449 = vdwg.mxu0
    %v450 = vmax.f32 %v442, 0.0
    %v451 = vmax.f32 %v444, 0.0
    %v452 = vmax.f32 %v446, 0.0
    %v453 = vmax.f32 %v448, 0.0
    %v454 = vpack.c.bf16 %v452, %v450
    %v455 = vpack.c.bf16 %v453, %v451
    %v456 = vld [vmem:[#allocation10] sm:$0xff]
    %v457 = vld [vmem:[#allocation10 + $0x8] sm:$0xff]
    %v458 = vld [vmem:[#allocation10 + $0x10] sm:$0xff]
    %v459 = vld [vmem:[#allocation10 + $0x18] sm:$0xff]
    %v460 = vld [vmem:[#allocation10 + $0x20] sm:$0xff]
    %v461 = vld [vmem:[#allocation10 + $0x28] sm:$0xff]
    %v462 = vld [vmem:[#allocation10 + $0x30] sm:$0xff]
    %v463 = vld [vmem:[#allocation10 + $0x38] sm:$0xff]
    %v464 = vld [vmem:[#allocation10 + $0x40] sm:$0xff]
    %v465 = vld [vmem:[#allocation10 + $0x48] sm:$0xff]
    %v466 = vld [vmem:[#allocation10 + $0x50] sm:$0xff]
    %v467 = vld [vmem:[#allocation10 + $0x58] sm:$0xff]
    %v468 = vld [vmem:[#allocation10 + $0x60] sm:$0xff]
    %v469 = vld [vmem:[#allocation10 + $0x68] sm:$0xff]
    %v470 = vld [vmem:[#allocation10 + $0x70] sm:$0xff]
    %v471 = vld [vmem:[#allocation10 + $0x78] sm:$0xff]
    %v472 = vld [vmem:[#allocation10 + $0x80] sm:$0xff]
    %v473 = vld [vmem:[#allocation10 + $0x88] sm:$0xff]
    %v474 = vld [vmem:[#allocation10 + $0x90] sm:$0xff]
    %v475 = vld [vmem:[#allocation10 + $0x98] sm:$0xff]
    %v476 = vld [vmem:[#allocation10 + $0xa0] sm:$0xff]
    %v477 = vld [vmem:[#allocation10 + $0xa8] sm:$0xff]
    %v478 = vld [vmem:[#allocation10 + $0xb0] sm:$0xff]
    %v479 = vld [vmem:[#allocation10 + $0xb8] sm:$0xff]
    %v480 = vld [vmem:[#allocation10 + $0xc0] sm:$0xff]
    %v481 = vld [vmem:[#allocation10 + $0xc8] sm:$0xff]
    %v482 = vld [vmem:[#allocation10 + $0xd0] sm:$0xff]
    %v483 = vld [vmem:[#allocation10 + $0xd8] sm:$0xff]
    %v484 = vld [vmem:[#allocation10 + $0xe0] sm:$0xff]
    %v485 = vld [vmem:[#allocation10 + $0xe8] sm:$0xff]
    %v486 = vld [vmem:[#allocation10 + $0xf0] sm:$0xff]
    %v487 = vld [vmem:[#allocation10 + $0xf8] sm:$0xff]
    %v488 = vld [vmem:[#allocation10 + $0x100] sm:$0xff]
    %v489 = vld [vmem:[#allocation10 + $0x108] sm:$0xff]
    %v490 = vld [vmem:[#allocation10 + $0x110] sm:$0xff]
    %v491 = vld [vmem:[#allocation10 + $0x118] sm:$0xff]
    %v492 = vld [vmem:[#allocation10 + $0x120] sm:$0xff]
    %v493 = vld [vmem:[#allocation10 + $0x128] sm:$0xff]
    %v494 = vld [vmem:[#allocation10 + $0x130] sm:$0xff]
    %v495 = vld [vmem:[#allocation10 + $0x138] sm:$0xff]
    %v496 = vld [vmem:[#allocation10 + $0x140] sm:$0xff]
    %v497 = vld [vmem:[#allocation10 + $0x148] sm:$0xff]
    %v498 = vld [vmem:[#allocation10 + $0x150] sm:$0xff]
    %v499 = vld [vmem:[#allocation10 + $0x158] sm:$0xff]
    %v500 = vld [vmem:[#allocation10 + $0x160] sm:$0xff]
    %v501 = vld [vmem:[#allocation10 + $0x168] sm:$0xff]
    %v502 = vld [vmem:[#allocation10 + $0x170] sm:$0xff]
    %v503 = vld [vmem:[#allocation10 + $0x178] sm:$0xff]
    %v504 = vld [vmem:[#allocation10 + $0x180] sm:$0xff]
    %v505 = vld [vmem:[#allocation10 + $0x188] sm:$0xff]
    %v506 = vld [vmem:[#allocation10 + $0x190] sm:$0xff]
    %v507 = vld [vmem:[#allocation10 + $0x198] sm:$0xff]
    %v508 = vld [vmem:[#allocation10 + $0x1a0] sm:$0xff]
    %v509 = vld [vmem:[#allocation10 + $0x1a8] sm:$0xff]
    %v510 = vld [vmem:[#allocation10 + $0x1b0] sm:$0xff]
    %v511 = vld [vmem:[#allocation10 + $0x1b8] sm:$0xff]
    %v512 = vld [vmem:[#allocation10 + $0x1c0] sm:$0xff]
    %v513 = vld [vmem:[#allocation10 + $0x1c8] sm:$0xff]
    %v514 = vld [vmem:[#allocation10 + $0x1d0] sm:$0xff]
    %v515 = vld [vmem:[#allocation10 + $0x1d8] sm:$0xff]
    %v516 = vld [vmem:[#allocation10 + $0x1e0] sm:$0xff]
    %v517 = vld [vmem:[#allocation10 + $0x1e8] sm:$0xff]
    %v518 = vld [vmem:[#allocation10 + $0x1f0] sm:$0xff]
    %v519 = vld [vmem:[#allocation10 + $0x1f8] sm:$0xff]
    %v520 = vld [vmem:[%s6 + $0x4] sm:$0xf]
    %v522 = vlaneseq
    %v523 = vshrl.u32 %v522, 7
    %v524 = vsub.s32 0, %v523
    %v525 = vrot.slane %v520, %v524
    %v526 = vlaneseq
    %v527 = vshrl.u32 %v526, 7
    %v528 = vsub.s32 1, %v527
    %v529 = vrot.slane %v520, %v528
    %v530 = vlaneseq
    %v531 = vshrl.u32 %v530, 7
    %v532 = vsub.s32 2, %v531
    %v533 = vrot.slane %v520, %v532
    %v534 = vlaneseq
    %v535 = vshrl.u32 %v534, 7
    %v536 = vsub.s32 3, %v535
    %v537 = vrot.slane %v520, %v536
    %v606 = vunpack.c.l.b16 %v456
    %v607 = vunpack.c.h.b16 %v456
    %v608 = vunpack.c.l.b16 %v457
    %v609 = vunpack.c.h.b16 %v457
    %v610 = vunpack.c.l.b16 %v458
    %v611 = vunpack.c.h.b16 %v458
    %v612 = vunpack.c.l.b16 %v459
    %v613 = vunpack.c.h.b16 %v459
    %v614 = vunpack.c.l.b16 %v460
    %v615 = vunpack.c.h.b16 %v460
    %v616 = vunpack.c.l.b16 %v461
    %v617 = vunpack.c.h.b16 %v461
    %v618 = vunpack.c.l.b16 %v462
    %v619 = vunpack.c.h.b16 %v462
    %v620 = vunpack.c.l.b16 %v463
    %v621 = vunpack.c.h.b16 %v463
    %v622 = vunpack.c.l.b16 %v464
    %v623 = vunpack.c.h.b16 %v464
    %v624 = vunpack.c.l.b16 %v465
    %v625 = vunpack.c.h.b16 %v465
    %v626 = vunpack.c.l.b16 %v466
    %v627 = vunpack.c.h.b16 %v466
    %v628 = vunpack.c.l.b16 %v467
    %v629 = vunpack.c.h.b16 %v467
    %v630 = vunpack.c.l.b16 %v468
    %v631 = vunpack.c.h.b16 %v468
    %v632 = vunpack.c.l.b16 %v469
    %v633 = vunpack.c.h.b16 %v469
    %v634 = vunpack.c.l.b16 %v470
    %v635 = vunpack.c.h.b16 %v470
    %v636 = vunpack.c.l.b16 %v471
    %v637 = vunpack.c.h.b16 %v471
    %v638 = vunpack.c.l.b16 %v472
    %v639 = vunpack.c.h.b16 %v472
    %v640 = vunpack.c.l.b16 %v473
    %v641 = vunpack.c.h.b16 %v473
    %v642 = vunpack.c.l.b16 %v474
    %v643 = vunpack.c.h.b16 %v474
    %v644 = vunpack.c.l.b16 %v475
    %v645 = vunpack.c.h.b16 %v475
    %v646 = vunpack.c.l.b16 %v476
    %v647 = vunpack.c.h.b16 %v476
    %v648 = vunpack.c.l.b16 %v477
    %v649 = vunpack.c.h.b16 %v477
    %v650 = vunpack.c.l.b16 %v478
    %v651 = vunpack.c.h.b16 %v478
    %v652 = vunpack.c.l.b16 %v479
    %v653 = vunpack.c.h.b16 %v479
    %v654 = vunpack.c.l.b16 %v480
    %v655 = vunpack.c.h.b16 %v480
    %v656 = vunpack.c.l.b16 %v481
    %v657 = vunpack.c.h.b16 %v481
    %v658 = vunpack.c.l.b16 %v482
    %v659 = vunpack.c.h.b16 %v482
    %v660 = vunpack.c.l.b16 %v483
    %v661 = vunpack.c.h.b16 %v483
    %v662 = vunpack.c.l.b16 %v484
    %v663 = vunpack.c.h.b16 %v484
    %v664 = vunpack.c.l.b16 %v485
    %v665 = vunpack.c.h.b16 %v485
    %v666 = vunpack.c.l.b16 %v486
    %v667 = vunpack.c.h.b16 %v486
    %v668 = vunpack.c.l.b16 %v487
    %v669 = vunpack.c.h.b16 %v487
    %v670 = vunpack.c.l.b16 %v488
    %v671 = vunpack.c.h.b16 %v488
    %v672 = vunpack.c.l.b16 %v489
    %v673 = vunpack.c.h.b16 %v489
    %v674 = vunpack.c.l.b16 %v490
    %v675 = vunpack.c.h.b16 %v490
    %v676 = vunpack.c.l.b16 %v491
    %v677 = vunpack.c.h.b16 %v491
    %v678 = vunpack.c.l.b16 %v492
    %v679 = vunpack.c.h.b16 %v492
    %v680 = vunpack.c.l.b16 %v493
    %v681 = vunpack.c.h.b16 %v493
    %v682 = vunpack.c.l.b16 %v494
    %v683 = vunpack.c.h.b16 %v494
    %v684 = vunpack.c.l.b16 %v495
    %v685 = vunpack.c.h.b16 %v495
    %v686 = vunpack.c.l.b16 %v496
    %v687 = vunpack.c.h.b16 %v496
    %v688 = vunpack.c.l.b16 %v497
    %v689 = vunpack.c.h.b16 %v497
    %v690 = vunpack.c.l.b16 %v498
    %v691 = vunpack.c.h.b16 %v498
    %v692 = vunpack.c.l.b16 %v499
    %v693 = vunpack.c.h.b16 %v499
    %v694 = vunpack.c.l.b16 %v500
    %v695 = vunpack.c.h.b16 %v500
    %v696 = vunpack.c.l.b16 %v501
    %v697 = vunpack.c.h.b16 %v501
    %v698 = vunpack.c.l.b16 %v502
    %v699 = vunpack.c.h.b16 %v502
    %v700 = vunpack.c.l.b16 %v503
    %v701 = vunpack.c.h.b16 %v503
    %v702 = vunpack.c.l.b16 %v504
    %v703 = vunpack.c.h.b16 %v504
    %v704 = vunpack.c.l.b16 %v505
    %v705 = vunpack.c.h.b16 %v505
    %v706 = vunpack.c.l.b16 %v506
    %v707 = vunpack.c.h.b16 %v506
    %v708 = vunpack.c.l.b16 %v507
    %v709 = vunpack.c.h.b16 %v507
    %v710 = vunpack.c.l.b16 %v508
    %v711 = vunpack.c.h.b16 %v508
    %v712 = vunpack.c.l.b16 %v509
    %v713 = vunpack.c.h.b16 %v509
    %v714 = vunpack.c.l.b16 %v510
    %v715 = vunpack.c.h.b16 %v510
    %v716 = vunpack.c.l.b16 %v511
    %v717 = vunpack.c.h.b16 %v511
    %v718 = vunpack.c.l.b16 %v512
    %v719 = vunpack.c.h.b16 %v512
    %v720 = vunpack.c.l.b16 %v513
    %v721 = vunpack.c.h.b16 %v513
    %v722 = vunpack.c.l.b16 %v514
    %v723 = vunpack.c.h.b16 %v514
    %v724 = vunpack.c.l.b16 %v515
    %v725 = vunpack.c.h.b16 %v515
    %v726 = vunpack.c.l.b16 %v516
    %v727 = vunpack.c.h.b16 %v516
    %v728 = vunpack.c.l.b16 %v517
    %v729 = vunpack.c.h.b16 %v517
    %v730 = vunpack.c.l.b16 %v518
    %v731 = vunpack.c.h.b16 %v518
    %v732 = vunpack.c.l.b16 %v519
    %v733 = vunpack.c.h.b16 %v519
    %v734 = vpack.c.b16 %v610, %v606
    %v735 = vpack.c.b16 %v611, %v607
    %v736 = vpack.c.b16 %v612, %v608
    %v737 = vpack.c.b16 %v613, %v609
    %v738 = vpack.c.b16 %v618, %v614
    %v739 = vpack.c.b16 %v619, %v615
    %v740 = vpack.c.b16 %v620, %v616
    %v741 = vpack.c.b16 %v621, %v617
    %v742 = vpack.c.b16 %v626, %v622
    %v743 = vpack.c.b16 %v627, %v623
    %v744 = vpack.c.b16 %v628, %v624
    %v745 = vpack.c.b16 %v629, %v625
    %v746 = vpack.c.b16 %v634, %v630
    %v747 = vpack.c.b16 %v635, %v631
    %v748 = vpack.c.b16 %v636, %v632
    %v749 = vpack.c.b16 %v637, %v633
    %v750 = vpack.c.b16 %v642, %v638
    %v751 = vpack.c.b16 %v643, %v639
    %v752 = vpack.c.b16 %v644, %v640
    %v753 = vpack.c.b16 %v645, %v641
    %v754 = vpack.c.b16 %v650, %v646
    %v755 = vpack.c.b16 %v651, %v647
    %v756 = vpack.c.b16 %v652, %v648
    %v757 = vpack.c.b16 %v653, %v649
    %v758 = vpack.c.b16 %v658, %v654
    %v759 = vpack.c.b16 %v659, %v655
    %v760 = vpack.c.b16 %v660, %v656
    %v761 = vpack.c.b16 %v661, %v657
    %v762 = vpack.c.b16 %v666, %v662
    %v763 = vpack.c.b16 %v667, %v663
    %v764 = vpack.c.b16 %v668, %v664
    %v765 = vpack.c.b16 %v669, %v665
    %v766 = vpack.c.b16 %v674, %v670
    %v767 = vpack.c.b16 %v675, %v671
    %v768 = vpack.c.b16 %v676, %v672
    %v769 = vpack.c.b16 %v677, %v673
    %v770 = vpack.c.b16 %v682, %v678
    %v771 = vpack.c.b16 %v683, %v679
    %v772 = vpack.c.b16 %v684, %v680
    %v773 = vpack.c.b16 %v685, %v681
    %v774 = vpack.c.b16 %v690, %v686
    %v775 = vpack.c.b16 %v691, %v687
    %v776 = vpack.c.b16 %v692, %v688
    %v777 = vpack.c.b16 %v693, %v689
    %v778 = vpack.c.b16 %v698, %v694
    %v779 = vpack.c.b16 %v699, %v695
    %v780 = vpack.c.b16 %v700, %v696
    %v781 = vpack.c.b16 %v701, %v697
    %v782 = vpack.c.b16 %v706, %v702
    %v783 = vpack.c.b16 %v707, %v703
    %v784 = vpack.c.b16 %v708, %v704
    %v785 = vpack.c.b16 %v709, %v705
    %v786 = vpack.c.b16 %v714, %v710
    %v787 = vpack.c.b16 %v715, %v711
    %v788 = vpack.c.b16 %v716, %v712
    %v789 = vpack.c.b16 %v717, %v713
    %v790 = vpack.c.b16 %v722, %v718
    %v791 = vpack.c.b16 %v723, %v719
    %v792 = vpack.c.b16 %v724, %v720
    %v793 = vpack.c.b16 %v725, %v721
    %v794 = vpack.c.b16 %v730, %v726
    %v795 = vpack.c.b16 %v731, %v727
    %v796 = vpack.c.b16 %v732, %v728
    %v797 = vpack.c.b16 %v733, %v729
    %862 = vmatprep.subr.bf16.mxu0 %v763
    %863 = vmatpush1.bf16.msra.mxu0 %v762
    %864 = vmatprep.subr.bf16.mxu0 %v759
    %865 = vmatpush1.bf16.msra.mxu0 %v758
    %866 = vmatprep.subr.bf16.mxu0 %v755
    %867 = vmatpush1.bf16.msra.mxu0 %v754
    %868 = vmatprep.subr.bf16.mxu0 %v751
    %869 = vmatpush1.bf16.msra.mxu0 %v750
    %870 = vmatprep.subr.bf16.mxu0 %v747
    %871 = vmatpush1.bf16.msra.mxu0 %v746
    %872 = vmatprep.subr.bf16.mxu0 %v743
    %873 = vmatpush1.bf16.msra.mxu0 %v742
    %874 = vmatprep.subr.bf16.mxu0 %v739
    %875 = vmatpush1.bf16.msra.mxu0 %v738
    %876 = vmatprep.subr.bf16.mxu0 %v735
    %877 = vmatpush1.bf16.msra.mxu0 %v734
    %878 = vmatprep.subr.bf16.mxu0 %v795
    %879 = vmatpush2.bf16.msra.mxu0 %v794
    %880 = vmatprep.subr.bf16.mxu0 %v791
    %881 = vmatpush2.bf16.msra.mxu0 %v790
    %882 = vmatprep.subr.bf16.mxu0 %v787
    %883 = vmatpush2.bf16.msra.mxu0 %v786
    %884 = vmatprep.subr.bf16.mxu0 %v783
    %885 = vmatpush2.bf16.msra.mxu0 %v782
    %886 = vmatprep.subr.bf16.mxu0 %v779
    %887 = vmatpush2.bf16.msra.mxu0 %v778
    %888 = vmatprep.subr.bf16.mxu0 %v775
    %889 = vmatpush2.bf16.msra.mxu0 %v774
    %890 = vmatprep.subr.bf16.mxu0 %v771
    %891 = vmatpush2.bf16.msra.mxu0 %v770
    %892 = vmatprep.subr.bf16.mxu0 %v767
    %893 = vmatpush2.bf16.msra.mxu0 %v766
    %894 = vmatprep.mubr.bf16.mxu0 %v455
    %895 = vmatmul.mubr.bf16.gmra.mxu0 %v454
    %v896 = vpop.f32.mrf.mxu0
    %v897 = vadd.f32 %v525, %v896
    %v898 = vpop.f32.mrf.mxu0
    %v899 = vadd.f32 %v529, %v898
    %v900 = vpop.f32.mrf.mxu0
    %v901 = vadd.f32 %v525, %v900
    %v902 = vpop.f32.mrf.mxu0
    %v903 = vadd.f32 %v529, %v902
    %904 = vdwg.mxu0
    %905 = vmatprep.subr.bf16.mxu0 %v765
    %906 = vmatpush1.bf16.msra.mxu0 %v764
    %907 = vmatprep.subr.bf16.mxu0 %v761
    %908 = vmatpush1.bf16.msra.mxu0 %v760
    %909 = vmatprep.subr.bf16.mxu0 %v757
    %910 = vmatpush1.bf16.msra.mxu0 %v756
    %911 = vmatprep.subr.bf16.mxu0 %v753
    %912 = vmatpush1.bf16.msra.mxu0 %v752
    %913 = vmatprep.subr.bf16.mxu0 %v749
    %914 = vmatpush1.bf16.msra.mxu0 %v748
    %915 = vmatprep.subr.bf16.mxu0 %v745
    %916 = vmatpush1.bf16.msra.mxu0 %v744
    %917 = vmatprep.subr.bf16.mxu0 %v741
    %918 = vmatpush1.bf16.msra.mxu0 %v740
    %919 = vmatprep.subr.bf16.mxu0 %v737
    %920 = vmatpush1.bf16.msra.mxu0 %v736
    %921 = vmatprep.subr.bf16.mxu0 %v797
    %922 = vmatpush2.bf16.msra.mxu0 %v796
    %923 = vmatprep.subr.bf16.mxu0 %v793
    %924 = vmatpush2.bf16.msra.mxu0 %v792
    %925 = vmatprep.subr.bf16.mxu0 %v789
    %926 = vmatpush2.bf16.msra.mxu0 %v788
    %927 = vmatprep.subr.bf16.mxu0 %v785
    %928 = vmatpush2.bf16.msra.mxu0 %v784
    %929 = vmatprep.subr.bf16.mxu0 %v781
    %930 = vmatpush2.bf16.msra.mxu0 %v780
    %931 = vmatprep.subr.bf16.mxu0 %v777
    %932 = vmatpush2.bf16.msra.mxu0 %v776
    %933 = vmatprep.subr.bf16.mxu0 %v773
    %934 = vmatpush2.bf16.msra.mxu0 %v772
    %935 = vmatprep.subr.bf16.mxu0 %v769
    %936 = vmatpush2.bf16.msra.mxu0 %v768
    %937 = vmatprep.mubr.bf16.mxu0 %v455
    %938 = vmatmul.mubr.bf16.gmra.mxu0 %v454
    %v939 = vpop.f32.mrf.mxu0
    %v940 = vadd.f32 %v533, %v939
    %v941 = vpop.f32.mrf.mxu0
    %v942 = vadd.f32 %v537, %v941
    %v943 = vpop.f32.mrf.mxu0
    %v944 = vadd.f32 %v533, %v943
    %v945 = vpop.f32.mrf.mxu0
    %v946 = vadd.f32 %v537, %v945
    %947 = vdwg.mxu0
    %v948 = vmax.f32 %v897, 0.0
    %v949 = vmax.f32 %v899, 0.0
    %v950 = vmax.f32 %v940, 0.0
    %v951 = vmax.f32 %v942, 0.0
    %v952 = vmax.f32 %v901, 0.0
    %v953 = vmax.f32 %v903, 0.0
    %v954 = vmax.f32 %v944, 0.0
    %v955 = vmax.f32 %v946, 0.0
    %v956 = vpack.c.bf16 %v952, %v948
    %v957 = vpack.c.bf16 %v953, %v949
    %v958 = vpack.c.bf16 %v954, %v950
    %v959 = vpack.c.bf16 %v955, %v951
    %v960 = vld [vmem:[#allocation11] sm:$0xf]
    %v961 = vld [vmem:[#allocation11 + $0x4] sm:$0xf]
    %v962 = vld [vmem:[#allocation11 + $0x8] sm:$0xf]
    %v963 = vld [vmem:[#allocation11 + $0xc] sm:$0xf]
    %v964 = vld [vmem:[#allocation11 + $0x10] sm:$0xf]
    %v965 = vld [vmem:[#allocation11 + $0x14] sm:$0xf]
    %v966 = vld [vmem:[#allocation11 + $0x18] sm:$0xf]
    %v967 = vld [vmem:[#allocation11 + $0x1c] sm:$0xf]
    %v968 = vld [vmem:[#allocation11 + $0x20] sm:$0xf]
    %v969 = vld [vmem:[#allocation11 + $0x24] sm:$0xf]
    %v970 = vld [vmem:[#allocation11 + $0x28] sm:$0xf]
    %v971 = vld [vmem:[#allocation11 + $0x2c] sm:$0xf]
    %v972 = vld [vmem:[#allocation11 + $0x30] sm:$0xf]
    %v973 = vld [vmem:[#allocation11 + $0x34] sm:$0xf]
    %v974 = vld [vmem:[#allocation11 + $0x38] sm:$0xf]
    %v975 = vld [vmem:[#allocation11 + $0x3c] sm:$0xf]
    %v976 = vld [vmem:[#allocation11 + $0x40] sm:$0xf]
    %v977 = vld [vmem:[#allocation11 + $0x44] sm:$0xf]
    %v978 = vld [vmem:[#allocation11 + $0x48] sm:$0xf]
    %v979 = vld [vmem:[#allocation11 + $0x4c] sm:$0xf]
    %v980 = vld [vmem:[#allocation11 + $0x50] sm:$0xf]
    %v981 = vld [vmem:[#allocation11 + $0x54] sm:$0xf]
    %v982 = vld [vmem:[#allocation11 + $0x58] sm:$0xf]
    %v983 = vld [vmem:[#allocation11 + $0x5c] sm:$0xf]
    %v984 = vld [vmem:[#allocation11 + $0x60] sm:$0xf]
    %v985 = vld [vmem:[#allocation11 + $0x64] sm:$0xf]
    %v986 = vld [vmem:[#allocation11 + $0x68] sm:$0xf]
    %v987 = vld [vmem:[#allocation11 + $0x6c] sm:$0xf]
    %v988 = vld [vmem:[#allocation11 + $0x70] sm:$0xf]
    %v989 = vld [vmem:[#allocation11 + $0x74] sm:$0xf]
    %v990 = vld [vmem:[#allocation11 + $0x78] sm:$0xf]
    %v991 = vld [vmem:[#allocation11 + $0x7c] sm:$0xf]
    %v992 = vld [vmem:[#allocation11 + $0x80] sm:$0xf]
    %v993 = vld [vmem:[#allocation11 + $0x84] sm:$0xf]
    %v994 = vld [vmem:[#allocation11 + $0x88] sm:$0xf]
    %v995 = vld [vmem:[#allocation11 + $0x8c] sm:$0xf]
    %v996 = vld [vmem:[#allocation11 + $0x90] sm:$0xf]
    %v997 = vld [vmem:[#allocation11 + $0x94] sm:$0xf]
    %v998 = vld [vmem:[#allocation11 + $0x98] sm:$0xf]
    %v999 = vld [vmem:[#allocation11 + $0x9c] sm:$0xf]
    %v1000 = vld [vmem:[#allocation11 + $0xa0] sm:$0xf]
    %v1001 = vld [vmem:[#allocation11 + $0xa4] sm:$0xf]
    %v1002 = vld [vmem:[#allocation11 + $0xa8] sm:$0xf]
    %v1003 = vld [vmem:[#allocation11 + $0xac] sm:$0xf]
    %v1004 = vld [vmem:[#allocation11 + $0xb0] sm:$0xf]
    %v1005 = vld [vmem:[#allocation11 + $0xb4] sm:$0xf]
    %v1006 = vld [vmem:[#allocation11 + $0xb8] sm:$0xf]
    %v1007 = vld [vmem:[#allocation11 + $0xbc] sm:$0xf]
    %v1008 = vld [vmem:[#allocation11 + $0xc0] sm:$0xf]
    %v1009 = vld [vmem:[#allocation11 + $0xc4] sm:$0xf]
    %v1010 = vld [vmem:[#allocation11 + $0xc8] sm:$0xf]
    %v1011 = vld [vmem:[#allocation11 + $0xcc] sm:$0xf]
    %v1012 = vld [vmem:[#allocation11 + $0xd0] sm:$0xf]
    %v1013 = vld [vmem:[#allocation11 + $0xd4] sm:$0xf]
    %v1014 = vld [vmem:[#allocation11 + $0xd8] sm:$0xf]
    %v1015 = vld [vmem:[#allocation11 + $0xdc] sm:$0xf]
    %v1016 = vld [vmem:[#allocation11 + $0xe0] sm:$0xf]
    %v1017 = vld [vmem:[#allocation11 + $0xe4] sm:$0xf]
    %v1018 = vld [vmem:[#allocation11 + $0xe8] sm:$0xf]
    %v1019 = vld [vmem:[#allocation11 + $0xec] sm:$0xf]
    %v1020 = vld [vmem:[#allocation11 + $0xf0] sm:$0xf]
    %v1021 = vld [vmem:[#allocation11 + $0xf4] sm:$0xf]
    %v1022 = vld [vmem:[#allocation11 + $0xf8] sm:$0xf]
    %v1023 = vld [vmem:[#allocation11 + $0xfc] sm:$0xf]
    %v1024 = vld [vmem:[%s6 + $0x8] sm:$0x1]
    %v1026 = vlaneseq
    %v1027 = vshrl.u32 %v1026, 7
    %v1028 = vsub.s32 0, %v1027
    %v1029 = vrot.slane %v1024, %v1028
    %v1095 = vunpack.c.l.b16 %v960
    %v1096 = vunpack.c.l.b16 %v961
    %v1097 = vunpack.c.l.b16 %v962
    %v1098 = vunpack.c.l.b16 %v963
    %v1099 = vunpack.c.l.b16 %v964
    %v1100 = vunpack.c.l.b16 %v965
    %v1101 = vunpack.c.l.b16 %v966
    %v1102 = vunpack.c.l.b16 %v967
    %v1103 = vunpack.c.l.b16 %v968
    %v1104 = vunpack.c.l.b16 %v969
    %v1105 = vunpack.c.l.b16 %v970
    %v1106 = vunpack.c.l.b16 %v971
    %v1107 = vunpack.c.l.b16 %v972
    %v1108 = vunpack.c.l.b16 %v973
    %v1109 = vunpack.c.l.b16 %v974
    %v1110 = vunpack.c.l.b16 %v975
    %v1111 = vunpack.c.l.b16 %v976
    %v1112 = vunpack.c.l.b16 %v977
    %v1113 = vunpack.c.l.b16 %v978
    %v1114 = vunpack.c.l.b16 %v979
    %v1115 = vunpack.c.l.b16 %v980
    %v1116 = vunpack.c.l.b16 %v981
    %v1117 = vunpack.c.l.b16 %v982
    %v1118 = vunpack.c.l.b16 %v983
    %v1119 = vunpack.c.l.b16 %v984
    %v1120 = vunpack.c.l.b16 %v985
    %v1121 = vunpack.c.l.b16 %v986
    %v1122 = vunpack.c.l.b16 %v987
    %v1123 = vunpack.c.l.b16 %v988
    %v1124 = vunpack.c.l.b16 %v989
    %v1125 = vunpack.c.l.b16 %v990
    %v1126 = vunpack.c.l.b16 %v991
    %v1127 = vunpack.c.l.b16 %v992
    %v1128 = vunpack.c.l.b16 %v993
    %v1129 = vunpack.c.l.b16 %v994
    %v1130 = vunpack.c.l.b16 %v995
    %v1131 = vunpack.c.l.b16 %v996
    %v1132 = vunpack.c.l.b16 %v997
    %v1133 = vunpack.c.l.b16 %v998
    %v1134 = vunpack.c.l.b16 %v999
    %v1135 = vunpack.c.l.b16 %v1000
    %v1136 = vunpack.c.l.b16 %v1001
    %v1137 = vunpack.c.l.b16 %v1002
    %v1138 = vunpack.c.l.b16 %v1003
    %v1139 = vunpack.c.l.b16 %v1004
    %v1140 = vunpack.c.l.b16 %v1005
    %v1141 = vunpack.c.l.b16 %v1006
    %v1142 = vunpack.c.l.b16 %v1007
    %v1143 = vunpack.c.l.b16 %v1008
    %v1144 = vunpack.c.l.b16 %v1009
    %v1145 = vunpack.c.l.b16 %v1010
    %v1146 = vunpack.c.l.b16 %v1011
    %v1147 = vunpack.c.l.b16 %v1012
    %v1148 = vunpack.c.l.b16 %v1013
    %v1149 = vunpack.c.l.b16 %v1014
    %v1150 = vunpack.c.l.b16 %v1015
    %v1151 = vunpack.c.l.b16 %v1016
    %v1152 = vunpack.c.l.b16 %v1017
    %v1153 = vunpack.c.l.b16 %v1018
    %v1154 = vunpack.c.l.b16 %v1019
    %v1155 = vunpack.c.l.b16 %v1020
    %v1156 = vunpack.c.l.b16 %v1021
    %v1157 = vunpack.c.l.b16 %v1022
    %v1158 = vunpack.c.l.b16 %v1023
    %v1159 = vpack.c.b16 %v1096, %v1095
    %v1160 = vpack.c.b16 %v1098, %v1097
    %v1161 = vpack.c.b16 %v1100, %v1099
    %v1162 = vpack.c.b16 %v1102, %v1101
    %v1163 = vpack.c.b16 %v1104, %v1103
    %v1164 = vpack.c.b16 %v1106, %v1105
    %v1165 = vpack.c.b16 %v1108, %v1107
    %v1166 = vpack.c.b16 %v1110, %v1109
    %v1167 = vpack.c.b16 %v1112, %v1111
    %v1168 = vpack.c.b16 %v1114, %v1113
    %v1169 = vpack.c.b16 %v1116, %v1115
    %v1170 = vpack.c.b16 %v1118, %v1117
    %v1171 = vpack.c.b16 %v1120, %v1119
    %v1172 = vpack.c.b16 %v1122, %v1121
    %v1173 = vpack.c.b16 %v1124, %v1123
    %v1174 = vpack.c.b16 %v1126, %v1125
    %v1175 = vpack.c.b16 %v1128, %v1127
    %v1176 = vpack.c.b16 %v1130, %v1129
    %v1177 = vpack.c.b16 %v1132, %v1131
    %v1178 = vpack.c.b16 %v1134, %v1133
    %v1179 = vpack.c.b16 %v1136, %v1135
    %v1180 = vpack.c.b16 %v1138, %v1137
    %v1181 = vpack.c.b16 %v1140, %v1139
    %v1182 = vpack.c.b16 %v1142, %v1141
    %v1183 = vpack.c.b16 %v1144, %v1143
    %v1184 = vpack.c.b16 %v1146, %v1145
    %v1185 = vpack.c.b16 %v1148, %v1147
    %v1186 = vpack.c.b16 %v1150, %v1149
    %v1187 = vpack.c.b16 %v1152, %v1151
    %v1188 = vpack.c.b16 %v1154, %v1153
    %v1189 = vpack.c.b16 %v1156, %v1155
    %v1190 = vpack.c.b16 %v1158, %v1157
    %1223 = vmatprep.subr.bf16.mxu0 0
    %1224 = vmatpush1.bf16.msra.mxu0 %v1166
    %1225 = vmatprep.subr.bf16.mxu0 0
    %1226 = vmatpush1.bf16.msra.mxu0 %v1165
    %1227 = vmatprep.subr.bf16.mxu0 0
    %1228 = vmatpush1.bf16.msra.mxu0 %v1164
    %1229 = vmatprep.subr.bf16.mxu0 0
    %1230 = vmatpush1.bf16.msra.mxu0 %v1163
    %1231 = vmatprep.subr.bf16.mxu0 0
    %1232 = vmatpush1.bf16.msra.mxu0 %v1162
    %1233 = vmatprep.subr.bf16.mxu0 0
    %1234 = vmatpush1.bf16.msra.mxu0 %v1161
    %1235 = vmatprep.subr.bf16.mxu0 0
    %1236 = vmatpush1.bf16.msra.mxu0 %v1160
    %1237 = vmatprep.subr.bf16.mxu0 0
    %1238 = vmatpush1.bf16.msra.mxu0 %v1159
    %1239 = vmatprep.subr.bf16.mxu0 0
    %1240 = vmatpush2.bf16.msra.mxu0 %v1174
    %1241 = vmatprep.subr.bf16.mxu0 0
    %1242 = vmatpush2.bf16.msra.mxu0 %v1173
    %1243 = vmatprep.subr.bf16.mxu0 0
    %1244 = vmatpush2.bf16.msra.mxu0 %v1172
    %1245 = vmatprep.subr.bf16.mxu0 0
    %1246 = vmatpush2.bf16.msra.mxu0 %v1171
    %1247 = vmatprep.subr.bf16.mxu0 0
    %1248 = vmatpush2.bf16.msra.mxu0 %v1170
    %1249 = vmatprep.subr.bf16.mxu0 0
    %1250 = vmatpush2.bf16.msra.mxu0 %v1169
    %1251 = vmatprep.subr.bf16.mxu0 0
    %1252 = vmatpush2.bf16.msra.mxu0 %v1168
    %1253 = vmatprep.subr.bf16.mxu0 0
    %1254 = vmatpush2.bf16.msra.mxu0 %v1167
    %1255 = vmatprep.mubr.bf16.mxu0 %v957
    %1256 = vmatmul.mubr.bf16.gmra.mxu0 %v956
    %v1257 = vpop.f32.mrf.mxu0
    %v1258 = vadd.f32 %v1029, %v1257
    %v1259 = vpop.f32.mrf.mxu0
    %v1260 = vpop.f32.mrf.mxu0
    %v1261 = vadd.f32 %v1029, %v1260
    %v1262 = vpop.f32.mrf.mxu0
    %1263 = vdwg.mxu0
    %1264 = vmatprep.subr.bf16.mxu0 0
    %1265 = vmatpush1.bf16.msra.mxu0 %v1182
    %1266 = vmatprep.subr.bf16.mxu0 0
    %1267 = vmatpush1.bf16.msra.mxu0 %v1181
    %1268 = vmatprep.subr.bf16.mxu0 0
    %1269 = vmatpush1.bf16.msra.mxu0 %v1180
    %1270 = vmatprep.subr.bf16.mxu0 0
    %1271 = vmatpush1.bf16.msra.mxu0 %v1179
    %1272 = vmatprep.subr.bf16.mxu0 0
    %1273 = vmatpush1.bf16.msra.mxu0 %v1178
    %1274 = vmatprep.subr.bf16.mxu0 0
    %1275 = vmatpush1.bf16.msra.mxu0 %v1177
    %1276 = vmatprep.subr.bf16.mxu0 0
    %1277 = vmatpush1.bf16.msra.mxu0 %v1176
    %1278 = vmatprep.subr.bf16.mxu0 0
    %1279 = vmatpush1.bf16.msra.mxu0 %v1175
    %1280 = vmatprep.subr.bf16.mxu0 0
    %1281 = vmatpush2.bf16.msra.mxu0 %v1190
    %1282 = vmatprep.subr.bf16.mxu0 0
    %1283 = vmatpush2.bf16.msra.mxu0 %v1189
    %1284 = vmatprep.subr.bf16.mxu0 0
    %1285 = vmatpush2.bf16.msra.mxu0 %v1188
    %1286 = vmatprep.subr.bf16.mxu0 0
    %1287 = vmatpush2.bf16.msra.mxu0 %v1187
    %1288 = vmatprep.subr.bf16.mxu0 0
    %1289 = vmatpush2.bf16.msra.mxu0 %v1186
    %1290 = vmatprep.subr.bf16.mxu0 0
    %1291 = vmatpush2.bf16.msra.mxu0 %v1185
    %1292 = vmatprep.subr.bf16.mxu0 0
    %1293 = vmatpush2.bf16.msra.mxu0 %v1184
    %1294 = vmatprep.subr.bf16.mxu0 0
    %1295 = vmatpush2.bf16.msra.mxu0 %v1183
    %1296 = vmatprep.mubr.bf16.mxu0 %v959
    %1297 = vmatmul.mubr.bf16.gmra.mxu0 %v958
    %v1298 = vpop.f32.mrf.mxu0
    %v1299 = vadd.f32 %v1258, %v1298
    %v1300 = vpop.f32.mrf.mxu0
    %v1301 = vpop.f32.mrf.mxu0
    %v1302 = vadd.f32 %v1261, %v1301
    %v1303 = vpop.f32.mrf.mxu0
    %1304 = vdwg.mxu0
    %1305 = vst [vmem:[#allocation13] sm:$0xff] %v1299
    %1306 = vst [vmem:[#allocation13 + $0x8] sm:$0xff] %v1302
    // Predicated region
    $region54: #{tpu_custom_call.1} parent=1 // pred_check
      _
    $region55: #{tpu_custom_call.1} parent=1 // pred_check_branch
      %1308 = sbr.rel (0) target = $region57
    $region56: #{tpu_custom_call.1} parent=1 // pred_region
      %s1310 = ssub.s32 256, 256
      %1311 = vsyncadd [#allocation4], %s1310
      %s1312 = sshll.u32 [#allocation13], 4
      %s1313 = int_to_ptr.vmem [resolvable:$true] %s1312
      %1318 = dma.vmem_to_hbm [thread:$0]  %s1313, 256, %s7, [#allocation4], 128, 128, 8
    $region57: #{tpu_custom_call.1} parent=1 // pred_fallthru
      _
    // Predicated region
    $region58: #{tpu_custom_call.1} parent=1 // pred_check
      _
    $region59: #{tpu_custom_call.1} parent=1 // pred_check_branch
      %1320 = sbr.rel (0) target = $region61
    $region60: #{tpu_custom_call.1} parent=1 // pred_region
      %1321 = dma.done [#allocation4], 256
    $region61: #{tpu_custom_call.1} parent=1 // pred_fallthru
      _
    %1322 = vsyncpa [#allocation3], 1
    %1323 = vsyncpa [#allocation6], 1
    %1324 = vsyncpa [#allocation9], 1
    %1325 = vsyncpa [#allocation12], 1
    %1326 = vsyncpa [#allocation4], 1

</llo_original>
